<compile_context>
chip_gen: v7x
topology: tpu7x:2x2x1
jax: 0.10.0
libtpu: 0.0.40
codegen_flags: <defaults>
</compile_context>

<pallas_src>
import jax
import jax.numpy as jnp
from jax.experimental import pallas as pl
from jax.experimental.pallas import tpu as pltpu


_LANE = 128
_MAX_TILE_HW = 8192          # lanes per spatial tile; sized for the smallest VMEM target (v7x)
_NUM_CORE_SPLITS = 2         # leading 'parallel' grid axis (uses both TCs on v7x)


def _round_up(x, m):
    return ((x + m - 1) // m) * m


def _make_dice_kernel(num_classes, tile_hw, s_per_split, hw_valid, needs_mask):
    """Builds the per-tile reduction kernel (static params captured by closure)."""

    def kernel(logits_ref, labels_ref, inter_ref, card_ref):
        # logits_ref : (1, C, TILE)  native dtype
        # labels_ref : (1, 1, TILE)  native integer dtype
        # inter_ref  : (1, 1, C) f32 accumulator (resident per core-split row)
        # card_ref   : (1, 1, C) f32 accumulator
        n = pl.program_id(1)
        s = pl.program_id(2)

        @pl.when((n == 0) & (s == 0))
        def _():
            inter_ref[...] = jnp.zeros_like(inter_ref)
            card_ref[...] = jnp.zeros_like(card_ref)

        x = logits_ref[...].astype(jnp.float32)        # cast per-tile, not in HBM
        lab = labels_ref[...].astype(jnp.int32)

        # Numerically-stable softmax over the channel (sublane) axis; the
        # normalization is hoisted to a single reciprocal per pixel.
        m = jnp.max(x, axis=1, keepdims=True)          # (1, 1, TILE)
        e = jnp.exp(x - m)                             # (1, C, TILE)  EUP
        denom = jnp.sum(e, axis=1, keepdims=True)      # (1, 1, TILE)
        p = e * pl.reciprocal(denom)                   # exact (keeps 1e-5 tolerance)

        if needs_mask:
            # Zero out padded lanes (spatial axis padded up to a tile multiple).
            core = pl.program_id(0)
            base = (core * s_per_split + s) * tile_hw
            lane = jax.lax.broadcasted_iota(jnp.int32, (1, 1, tile_hw), 2)
            valid = (base + lane) < hw_valid
            p = jnp.where(valid, p, 0.0)
            lab = jnp.where(valid, lab, -1)

        # One-hot over C classes (out-of-range labels match nothing, exactly
        # like the PyTorch `labels == c` loop).
        c_ids = jax.lax.broadcasted_iota(jnp.int32, (1, num_classes, tile_hw), 1)
        onehot = (lab == c_ids).astype(jnp.float32)    # broadcast (1,1,T) vs (1,C,T)

        # Lane reductions -> (1, C); avoid materializing a p+onehot temporary.
        inter_ref[...] += jnp.sum(p * onehot, axis=2)[None]
        card_ref[...] += (jnp.sum(p, axis=2) + jnp.sum(onehot, axis=2))[None]

    return kernel


def dice_loss_pallas(logits, labels, eps=1e-5):
    """Replicates DiceLoss.forward(logits, labels) -> (dice_loss, dice_score)."""
    if labels.ndim == logits.ndim:                    # (N, 1, H, W) -> (N, H, W)
        labels = jnp.squeeze(labels, axis=1)

    N, C, H, W = logits.shape
    HW = H * W

    # Keep native dtypes (bf16 logits / int8 labels fine); kernel casts per-tile.
    lg = logits.reshape(N, C, HW)
    lb = labels.reshape(N, 1, HW)

    # Spatial tiling: TILE is a multiple of 128, capped so double-buffered
    # inputs stay far below the smallest scoped-VMEM budget (v5e 16 MiB,
    # v7x 32 MiB).  Padded HW is a multiple of _NUM_CORE_SPLITS * TILE so the
    # leading 'parallel' axis splits the spatial tiles evenly.
    hw_lanes = _round_up(HW, _LANE)
    if hw_lanes >= _NUM_CORE_SPLITS * _MAX_TILE_HW:
        tile_hw = _MAX_TILE_HW
    else:
        tile_hw = max(_LANE, _round_up(hw_lanes // _NUM_CORE_SPLITS, _LANE))
    hw_pad = _round_up(HW, _NUM_CORE_SPLITS * tile_hw)
    s_per_split = hw_pad // (_NUM_CORE_SPLITS * tile_hw)
    needs_mask = hw_pad != HW

    if needs_mask:
        pad = hw_pad - HW
        lg = jnp.pad(lg, ((0, 0), (0, 0), (0, pad)))
        lb = jnp.pad(lb, ((0, 0), (0, 0), (0, pad)))

    kernel = _make_dice_kernel(C, tile_hw, s_per_split, HW, needs_mask)

    inter, card = pl.pallas_call(
        kernel,
        out_shape=(
            jax.ShapeDtypeStruct((_NUM_CORE_SPLITS, 1, C), jnp.float32),
            jax.ShapeDtypeStruct((_NUM_CORE_SPLITS, 1, C), jnp.float32),
        ),
        grid_spec=pltpu.PrefetchScalarGridSpec(
            num_scalar_prefetch=0,
            grid=(_NUM_CORE_SPLITS, N, s_per_split),
            in_specs=[
                pl.BlockSpec((1, C, tile_hw),
                             lambda c, n, s: (n, 0, c * s_per_split + s)),
                pl.BlockSpec((1, 1, tile_hw),
                             lambda c, n, s: (n, 0, c * s_per_split + s)),
            ],
            out_specs=(
                pl.BlockSpec((1, 1, C), lambda c, n, s: (c, 0, 0)),
                pl.BlockSpec((1, 1, C), lambda c, n, s: (c, 0, 0)),
            ),
        ),
        compiler_params=pltpu.CompilerParams(
            # leading split axis is parallel (distinct accumulator rows);
            # batch + spatial-tile axes accumulate -> arbitrary.
            dimension_semantics=("parallel", "arbitrary", "arbitrary")),
    )(lg, lb)

    # Tiny epilogue: combine the per-core-split rows and apply the dice formula.
    intersection = jnp.sum(inter, axis=0)[0]          # (C,)
    cardinality = jnp.sum(card, axis=0)[0]            # (C,)
    dice_score = 2.0 * intersection / (cardinality + eps)
    dice_loss = jnp.mean(1.0 - dice_score)
    return dice_loss, dice_score


def _dice_loss_ref(logits, labels, eps=1e-5):
    """Pure-JAX reference mirroring the PyTorch forward exactly."""
    if labels.ndim != logits.ndim:
        labels = labels[:, None]
    C = logits.shape[1]
    onehot = jnp.stack([jnp.squeeze(labels == c, axis=1) for c in range(C)],
                       axis=1).astype(jnp.float32)
    p = jax.nn.softmax(logits.astype(jnp.float32), axis=1)
    dims = (0, 2, 3)
    intersection = jnp.sum(p * onehot, axis=dims)
    cardinality = jnp.sum(p + onehot, axis=dims)
    dice_score = 2.0 * intersection / (cardinality + eps)
    return jnp.mean(1.0 - dice_score), dice_score


if __name__ == "__main__":
    key = jax.random.PRNGKey(0)

    # Test 1: spatial size that tiles exactly (no padding path).
    k1, k2 = jax.random.split(key)
    N, C, H, W = 2, 4, 16, 16
    logits = jax.random.normal(k1, (N, C, H, W), dtype=jnp.float32)
    # labels in [0, C]; value C matches no class (same "no match" path as PyTorch).
    labels = jax.random.randint(k2, (N, H, W), minval=0, maxval=C + 1,
                                dtype=jnp.int32)
    loss, score = dice_loss_pallas(logits, labels)
    loss = jax.block_until_ready(loss)
    score = jax.block_until_ready(score)
    loss_ref, score_ref = _dice_loss_ref(logits, labels)
    assert jnp.allclose(loss, loss_ref, atol=1e-5, rtol=1e-5)
    assert jnp.allclose(score, score_ref, atol=1e-5, rtol=1e-5)

    # Test 2: ragged spatial size + (N, 1, H, W) labels (exercises the padding mask).
    k3, k4 = jax.random.split(k1)
    N2, C2, H2, W2 = 3, 4, 10, 10
    logits2 = jax.random.normal(k3, (N2, C2, H2, W2), dtype=jnp.float32)
    labels2 = jax.random.randint(k4, (N2, 1, H2, W2), minval=0, maxval=C2 + 1,
                                 dtype=jnp.int32)
    loss2, score2 = dice_loss_pallas(logits2, labels2)
    loss2 = jax.block_until_ready(loss2)
    score2 = jax.block_until_ready(score2)
    loss2_ref, score2_ref = _dice_loss_ref(logits2, labels2)
    assert jnp.allclose(loss2, loss2_ref, atol=1e-5, rtol=1e-5)
    assert jnp.allclose(score2, score2_ref, atol=1e-5, rtol=1e-5)

    print("KERNEL_OK")
</pallas_src>

<mosaic_0001>
module attributes {stable_mosaic.version = 11 : i64} {
  func.func @kernel(%arg0: i32, %arg1: i32, %arg2: i32, %arg3: memref<1x4x128xf32, #tpu.memory_space<vmem>>, %arg4: memref<1x1x128xi32, #tpu.memory_space<vmem>>, %arg5: memref<1x1x4xf32, #tpu.memory_space<vmem>>, %arg6: memref<1x1x4xf32, #tpu.memory_space<vmem>>) attributes {dimension_semantics = [#tpu.dimension_semantics<parallel>, #tpu.dimension_semantics<arbitrary>, #tpu.dimension_semantics<arbitrary>], iteration_bounds = array<i64: 2, 2, 1>, scalar_prefetch = 0 : i64, scratch_operands = 0 : i64, tpu.core_type = #tpu.core_type<tc>, window_params = [{transform_indices = @transform_0, window_bounds = array<i64: 1, 4, 128>}, {transform_indices = @transform_1, window_bounds = array<i64: 1, 1, 128>}, {transform_indices = @transform_2, window_bounds = array<i64: 1, 1, 4>}, {transform_indices = @transform_3, window_bounds = array<i64: 1, 1, 4>}]} {
    %c0_i32 = arith.constant 0 : i32
    %0 = arith.cmpi eq, %arg1, %c0_i32 : i32
    %c0_i32_0 = arith.constant 0 : i32
    %1 = arith.cmpi eq, %arg2, %c0_i32_0 : i32
    %2 = arith.andi %0, %1 : i1
    %3 = arith.extui %2 : i1 to i32
    %c0_i32_1 = arith.constant 0 : i32
    %4 = arith.cmpi ne, %3, %c0_i32_1 : i32
    scf.if %4 {
      %cst_23 = arith.constant 0.000000e+00 : f32
      %35 = vector.broadcast %cst_23 : f32 to vector<1x1x4xf32>
      %c0_24 = arith.constant 0 : index
      %c0_25 = arith.constant 0 : index
      %c0_26 = arith.constant 0 : index
      %36 = vector.load %arg5[%c0_24, %c0_25, %c0_26] : memref<1x1x4xf32, #tpu.memory_space<vmem>>, vector<1x1x4xf32>
      tpu.vector_store %arg5[%c0_24, %c0_25, %c0_26], %35 {strides = array<i32>} : memref<1x1x4xf32, #tpu.memory_space<vmem>>, vector<1x1x4xf32>,
      %cst_27 = arith.constant 0.000000e+00 : f32
      %37 = vector.broadcast %cst_27 : f32 to vector<1x1x4xf32>
      %c0_28 = arith.constant 0 : index
      %c0_29 = arith.constant 0 : index
      %c0_30 = arith.constant 0 : index
      %38 = vector.load %arg6[%c0_28, %c0_29, %c0_30] : memref<1x1x4xf32, #tpu.memory_space<vmem>>, vector<1x1x4xf32>
      tpu.vector_store %arg6[%c0_28, %c0_29, %c0_30], %37 {strides = array<i32>} : memref<1x1x4xf32, #tpu.memory_space<vmem>>, vector<1x1x4xf32>,
    } else {
    }
    %c0 = arith.constant 0 : index
    %c0_2 = arith.constant 0 : index
    %c0_3 = arith.constant 0 : index
    %5 = vector.load %arg3[%c0, %c0_2, %c0_3] : memref<1x4x128xf32, #tpu.memory_space<vmem>>, vector<1x4x128xf32>
    %c0_4 = arith.constant 0 : index
    %c0_5 = arith.constant 0 : index
    %c0_6 = arith.constant 0 : index
    %6 = vector.load %arg4[%c0_4, %c0_5, %c0_6] : memref<1x1x128xi32, #tpu.memory_space<vmem>>, vector<1x1x128xi32>
    %cst = arith.constant dense<0xFF800000> : vector<1x128xf32>
    %7 = vector.multi_reduction <maximumf>, %5, %cst [1] : vector<1x4x128xf32> to vector<1x128xf32>
    %8 = vector.shape_cast %7 : vector<1x128xf32> to vector<1x1x128xf32>
    %9 = vector.broadcast %8 : vector<1x1x128xf32> to vector<1x4x128xf32>
    %10 = arith.subf %5, %9 : vector<1x4x128xf32>
    %11 = math.exp %10 : vector<1x4x128xf32>
    %cst_7 = arith.constant dense<0.000000e+00> : vector<1x128xf32>
    %12 = vector.multi_reduction <add>, %11, %cst_7 [1] : vector<1x4x128xf32> to vector<1x128xf32>
    %13 = vector.shape_cast %12 : vector<1x128xf32> to vector<1x1x128xf32>
    %14 = tpu.reciprocal %13 : vector<1x1x128xf32> -> vector<1x1x128xf32>
    %15 = vector.broadcast %14 : vector<1x1x128xf32> to vector<1x4x128xf32>
    %16 = arith.mulf %11, %15 : vector<1x4x128xf32>
    %17 = tpu.iota {dimensions = array<i32: 1>} : vector<1x4x128xi32>
    %18 = vector.broadcast %6 : vector<1x1x128xi32> to vector<1x4x128xi32>
    %19 = arith.cmpi eq, %18, %17 : vector<1x4x128xi32>
    %20 = arith.extui %19 : vector<1x4x128xi1> to vector<1x4x128xi32>
    %21 = arith.sitofp %20 : vector<1x4x128xi32> to vector<1x4x128xf32>
    %c0_8 = arith.constant 0 : index
    %c0_9 = arith.constant 0 : index
    %c0_10 = arith.constant 0 : index
    %22 = vector.load %arg5[%c0_8, %c0_9, %c0_10] : memref<1x1x4xf32, #tpu.memory_space<vmem>>, vector<1x1x4xf32>
    %23 = arith.mulf %16, %21 : vector<1x4x128xf32>
    %cst_11 = arith.constant dense<0.000000e+00> : vector<1x4xf32>
    %24 = vector.multi_reduction <add>, %23, %cst_11 [2] : vector<1x4x128xf32> to vector<1x4xf32>
    %25 = vector.shape_cast %24 : vector<1x4xf32> to vector<1x1x4xf32>
    %26 = arith.addf %22, %25 : vector<1x1x4xf32>
    %c0_12 = arith.constant 0 : index
    %c0_13 = arith.constant 0 : index
    %c0_14 = arith.constant 0 : index
    %27 = vector.load %arg5[%c0_12, %c0_13, %c0_14] : memref<1x1x4xf32, #tpu.memory_space<vmem>>, vector<1x1x4xf32>
    tpu.vector_store %arg5[%c0_12, %c0_13, %c0_14], %26 {strides = array<i32>} : memref<1x1x4xf32, #tpu.memory_space<vmem>>, vector<1x1x4xf32>,
    %c0_15 = arith.constant 0 : index
    %c0_16 = arith.constant 0 : index
    %c0_17 = arith.constant 0 : index
    %28 = vector.load %arg6[%c0_15, %c0_16, %c0_17] : memref<1x1x4xf32, #tpu.memory_space<vmem>>, vector<1x1x4xf32>
    %cst_18 = arith.constant dense<0.000000e+00> : vector<1x4xf32>
    %29 = vector.multi_reduction <add>, %16, %cst_18 [2] : vector<1x4x128xf32> to vector<1x4xf32>
    %cst_19 = arith.constant dense<0.000000e+00> : vector<1x4xf32>
    %30 = vector.multi_reduction <add>, %21, %cst_19 [2] : vector<1x4x128xf32> to vector<1x4xf32>
    %31 = arith.addf %29, %30 : vector<1x4xf32>
    %32 = vector.shape_cast %31 : vector<1x4xf32> to vector<1x1x4xf32>
    %33 = arith.addf %28, %32 : vector<1x1x4xf32>
    %c0_20 = arith.constant 0 : index
    %c0_21 = arith.constant 0 : index
    %c0_22 = arith.constant 0 : index
    %34 = vector.load %arg6[%c0_20, %c0_21, %c0_22] : memref<1x1x4xf32, #tpu.memory_space<vmem>>, vector<1x1x4xf32>
    tpu.vector_store %arg6[%c0_20, %c0_21, %c0_22], %33 {strides = array<i32>} : memref<1x1x4xf32, #tpu.memory_space<vmem>>, vector<1x1x4xf32>,
    return
  }
  func.func @transform_0(%arg0: i32, %arg1: i32, %arg2: i32) -> (i32, i32, i32) {
    %c1_i32 = arith.constant 1 : i32
    %0 = arith.muli %arg0, %c1_i32 : i32
    %1 = arith.addi %0, %arg2 : i32
    %c0_i32 = arith.constant 0 : i32
    %c0_i32_0 = arith.constant 0 : i32
    return %arg1, %c0_i32, %1 : i32, i32, i32
  }
  func.func @transform_1(%arg0: i32, %arg1: i32, %arg2: i32) -> (i32, i32, i32) {
    %c1_i32 = arith.constant 1 : i32
    %0 = arith.muli %arg0, %c1_i32 : i32
    %1 = arith.addi %0, %arg2 : i32
    %c0_i32 = arith.constant 0 : i32
    %c0_i32_0 = arith.constant 0 : i32
    return %arg1, %c0_i32, %1 : i32, i32, i32
  }
  func.func @transform_2(%arg0: i32, %arg1: i32, %arg2: i32) -> (i32, i32, i32) {
    %c0_i32 = arith.constant 0 : i32
    %c0_i32_0 = arith.constant 0 : i32
    %c0_i32_1 = arith.constant 0 : i32
    return %arg0, %c0_i32, %c0_i32_0 : i32, i32, i32
  }
  func.func @transform_3(%arg0: i32, %arg1: i32, %arg2: i32) -> (i32, i32, i32) {
    %c0_i32 = arith.constant 0 : i32
    %c0_i32_0 = arith.constant 0 : i32
    %c0_i32_1 = arith.constant 0 : i32
    return %arg0, %c0_i32, %c0_i32_0 : i32, i32, i32
  }
}

</mosaic_0001>

<llo_original>
// kernel: tpu_custom_call.1
$region0: #{tpu_custom_call.1}
  #allocation0 [shape = 'u32[]', space=smem, size = 0x4, offset = 0x4, fixed_abs, tag = 'smem constant byte address 0x4 - core index']
  #allocation1 [shape = 'u32[144,128]{1,0:T(1,128)}', space=vmem, size = 0x12000, scoped, tag = 'internal scratch']
  %s0 = inlined_call_operand.hbm [shape: f32[2,4,256], index: 0, kind: input, shape index: {}]
  %s1 = inlined_call_operand.hbm [shape: s32[2,1,256], index: 1, kind: input, shape index: {}]
  %s2 = inlined_call_operand.hbm [shape: f32[2,1,4], index: 2, kind: output, shape index: {0}]
  %s3 = inlined_call_operand.hbm [shape: f32[2,1,4], index: 3, kind: output, shape index: {1}]
  %4 = xla_tuple %s2, %s3
  %s5 = sld [smem:[#allocation0]]
  $region61: #{tpu_custom_call.1} parent=0
    _
  %s7 = ssub.s32 1, %s5
  %s8 = scalar_select 0, %s7, %s5
  $region1: #{tpu_custom_call.1} parent=0
    #allocation2 [shape = 'u8[4096]{0}', space=vmem, size = 0x1000, scoped, tag = 'input window, operand 0']
    #allocation3 [shape = 's32[2]{0}', space=sflag, size = 0x8, scoped, tag = 'scoped memory for tpu_custom_call.1']
    #allocation4 [shape = 's32[2]{0}', space=sflag, size = 0x8, scoped, tag = 'scoped memory for tpu_custom_call.1']
    #allocation5 [shape = 'u8[1024]{0}', space=vmem, size = 0x400, scoped, tag = 'input window, operand 1']
    #allocation6 [shape = 's32[2]{0}', space=sflag, size = 0x8, scoped, tag = 'scoped memory for tpu_custom_call.1']
    #allocation7 [shape = 'u8[1024]{0}', space=vmem, size = 0x400, scoped, tag = 'output window, operand 0']
    #allocation8 [shape = 'u8[1024]{0}', space=vmem, size = 0x400, scoped, tag = 'output window, operand 1']
    #allocation9 [shape = 's32[2]{0}', space=sflag, size = 0x8, scoped, tag = 'scoped memory for tpu_custom_call.1']
    %9 = vsyncpa [#allocation3], 0
    %s10 = scalar_lea.sflag [#allocation3], 1
    %11 = vsyncpa %s10, 0
    %12 = vsyncpa [#allocation6], 0
    %s13 = scalar_lea.sflag [#allocation6], 1
    %14 = vsyncpa %s13, 0
    %15 = vsyncpa [#allocation4], 0
    %s16 = scalar_lea.sflag [#allocation4], 1
    %17 = vsyncpa %s16, 0
    %18 = vsyncpa [#allocation9], 0
    %s19 = scalar_lea.sflag [#allocation9], 1
    %20 = vsyncpa %s19, 0
    loop: start=0, step=1, limit=6
    $region2: #{tpu_custom_call.1} parent=1 // loop_pre_header
      _
    $region3: #{tpu_custom_call.1} parent=1 // loop_header
      %s22 = sphi 0, %s26
      %p23 = scmp.ge.s32.totalorder %s22, 6
      %s29 = sphi 0, %s48
      %s30 = sphi 0, %s44
      %s31 = sphi 0, %s40
      %s32 = sphi 0, %s29
      %s33 = sphi 0, %s30
      %s34 = sphi 0, %s31
      %s35 = sphi 0, %s32
      %s36 = sphi 0, %s33
      %s37 = sphi 0, %s34
      %s55 = sphi 0, %s57
      %s58 = sphi 0, %s55
      %s59 = sphi 0, %s58
      %s75 = sphi 0, %s59
      %s85 = sphi 0, %s87
      %s88 = sphi 0, %s85
      %s89 = sphi 0, %s88
      %s105 = sphi 0, %s89
      %s111 = sphi 0, %s113
      %s114 = sphi 0, %s111
      %s115 = sphi 0, %s114
      %s131 = sphi 0, %s115
      %s137 = sphi 0, %s139
      %s140 = sphi 0, %s137
      %s141 = sphi 0, %s140
      %s157 = sphi 0, %s141
    $region4: #{tpu_custom_call.1} parent=1 // loop_header_branch
      %25 = sbr.rel (%p23) target = $region8
    $region5: #{tpu_custom_call.1} parent=1 // loop_body
      %s27 = ssub.s32 %s22, 1
      %s28 = ssub.s32 %s22, 2
      %s38 = sadd.s32 1, %s31
      %p39 = scmp.ge.s32.totalorder %s38, 1
      %s40 = scalar_select %p39, 0, %s38
      %s41 = sadd.s32 1, %s30
      %s42 = scalar_select %p39, %s41, %s30
      %p43 = scmp.ge.s32.totalorder %s42, 2
      %s44 = scalar_select %p43, 0, %s42
      %s45 = sadd.s32 1, %s29
      %s46 = scalar_select %p43, %s45, %s29
      %p47 = scmp.ge.s32.totalorder %s46, 2
      %s48 = scalar_select %p47, 0, %s46
      %s49 = sadd.s32 %s29, %s31
      %s50 = sadd.s32 %s48, %s40
      %s51 = ssub.s32 %s30, %s44
      %s52 = ssub.s32 %s49, %s50
      %s53 = sor.u32 %s51, %s52
      %p54 = scmp.eq.s32.totalorder %s53, 0
      %s56 = sadd.s32 %s55, 1
      %s57 = scalar_select %p54, %s55, %s56
      %p60 = pneg %p54
      %p61 = scmp.eq.s32.totalorder %s22, 3
      %p62 = por %p60, %p61
      %p63 = scmp.ne.s32.totalorder %s55, %s58
      %p64 = scmp.eq.s32.totalorder %s22, 0
      %p65 = por %p63, %p64
      %p66 = scmp.ne.s32.totalorder %s55, %s58
      %p67 = scmp.eq.s32.totalorder %s27, 3
      %p68 = por %p66, %p67
      %p69 = scmp.ne.s32.totalorder %s58, %s59
      %p70 = scmp.eq.s32.totalorder %s27, 0
      %p71 = por %p69, %p70
      %p72 = scmp.ne.s32.totalorder %s58, %s59
      %p73 = scmp.eq.s32.totalorder %s28, 3
      %p74 = por %p72, %p73
      %p76 = scmp.ne.s32.totalorder %s59, %s75
      %p77 = scmp.eq.s32.totalorder %s28, 0
      %p78 = por %p76, %p77
      %s79 = sadd.s32 %s29, %s31
      %s80 = sadd.s32 %s48, %s40
      %s81 = ssub.s32 %s30, %s44
      %s82 = ssub.s32 %s79, %s80
      %s83 = sor.u32 %s81, %s82
      %p84 = scmp.eq.s32.totalorder %s83, 0
      %s86 = sadd.s32 %s85, 1
      %s87 = scalar_select %p84, %s85, %s86
      %p90 = pneg %p84
      %p91 = scmp.eq.s32.totalorder %s22, 3
      %p92 = por %p90, %p91
      %p93 = scmp.ne.s32.totalorder %s85, %s88
      %p94 = scmp.eq.s32.totalorder %s22, 0
      %p95 = por %p93, %p94
      %p96 = scmp.ne.s32.totalorder %s85, %s88
      %p97 = scmp.eq.s32.totalorder %s27, 3
      %p98 = por %p96, %p97
      %p99 = scmp.ne.s32.totalorder %s88, %s89
      %p100 = scmp.eq.s32.totalorder %s27, 0
      %p101 = por %p99, %p100
      %p102 = scmp.ne.s32.totalorder %s88, %s89
      %p103 = scmp.eq.s32.totalorder %s28, 3
      %p104 = por %p102, %p103
      %p106 = scmp.ne.s32.totalorder %s89, %s105
      %p107 = scmp.eq.s32.totalorder %s28, 0
      %p108 = por %p106, %p107
      %s109 = ssub.s32 %s29, %s48
      %p110 = scmp.eq.s32.totalorder %s109, 0
      %s112 = sadd.s32 %s111, 1
      %s113 = scalar_select %p110, %s111, %s112
      %p116 = pneg %p110
      %p117 = scmp.eq.s32.totalorder %s22, 3
      %p118 = por %p116, %p117
      %p119 = scmp.ne.s32.totalorder %s111, %s114
      %p120 = scmp.eq.s32.totalorder %s22, 0
      %p121 = por %p119, %p120
      %p122 = scmp.ne.s32.totalorder %s111, %s114
      %p123 = scmp.eq.s32.totalorder %s27, 3
      %p124 = por %p122, %p123
      %p125 = scmp.ne.s32.totalorder %s114, %s115
      %p126 = scmp.eq.s32.totalorder %s27, 0
      %p127 = por %p125, %p126
      %p128 = scmp.ne.s32.totalorder %s114, %s115
      %p129 = scmp.eq.s32.totalorder %s28, 3
      %p130 = por %p128, %p129
      %p132 = scmp.ne.s32.totalorder %s115, %s131
      %p133 = scmp.eq.s32.totalorder %s28, 0
      %p134 = por %p132, %p133
      %s135 = ssub.s32 %s29, %s48
      %p136 = scmp.eq.s32.totalorder %s135, 0
      %s138 = sadd.s32 %s137, 1
      %s139 = scalar_select %p136, %s137, %s138
      %p142 = pneg %p136
      %p143 = scmp.eq.s32.totalorder %s22, 3
      %p144 = por %p142, %p143
      %p145 = scmp.ne.s32.totalorder %s137, %s140
      %p146 = scmp.eq.s32.totalorder %s22, 0
      %p147 = por %p145, %p146
      %p148 = scmp.ne.s32.totalorder %s137, %s140
      %p149 = scmp.eq.s32.totalorder %s27, 3
      %p150 = por %p148, %p149
      %p151 = scmp.ne.s32.totalorder %s140, %s141
      %p152 = scmp.eq.s32.totalorder %s27, 0
      %p153 = por %p151, %p152
      %p154 = scmp.ne.s32.totalorder %s140, %s141
      %p155 = scmp.eq.s32.totalorder %s28, 3
      %p156 = por %p154, %p155
      %p158 = scmp.ne.s32.totalorder %s141, %s157
      %p159 = scmp.eq.s32.totalorder %s28, 0
      %p160 = por %p158, %p159
      %p161 = scmp.le.s32.totalorder 1, %s22
      %p162 = scmp.lt.s32.totalorder %s22, 5
      %p163 = pnand %p161, %p162
      %p164 = pneg %p163
      // Predicated region
      $region9: #{tpu_custom_call.1} parent=5 // pred_check
        _
      $region10: #{tpu_custom_call.1} parent=5 // pred_check_branch
        %166 = sbr.rel (%p163) target = $region12
      $region11: #{tpu_custom_call.1} parent=5 // pred_region
        %s167 = ssub.s32 %s22, 1
      $region12: #{tpu_custom_call.1} parent=5 // pred_fallthru
        _
      %p168 = scmp.lt.s32.totalorder %s22, 4
      // Predicated region
      $region13: #{tpu_custom_call.1} parent=5 // pred_check
        %p169 = pneg %p168
      $region14: #{tpu_custom_call.1} parent=5 // pred_check_branch
        %171 = sbr.rel (%p169) target = $region16
      $region15: #{tpu_custom_call.1} parent=5 // pred_region
        // Predicated region
        $region17: #{tpu_custom_call.1} parent=15 // pred_check
          %p172 = pneg %p65
        $region18: #{tpu_custom_call.1} parent=15 // pred_check_branch
          %174 = sbr.rel (%p172) target = $region20
        $region19: #{tpu_custom_call.1} parent=15 // pred_region
          %s175 = sand.u32 %s55, 1
          %s176 = scalar_lea.sflag [#allocation3], %s175
          %s177 = sand.u32 %s55, 1
          %s178 = smul.addr %s177, 4
          %s179 = scalar_lea.vmem [#allocation2], %s178
          %s180 = sadd.s32 %s29, %s31
          %s182 = ssub.s32 64, 64
          %183 = vsyncadd %s176, %s182
          %s184 = smul.addr %s30, 2
          %s185 = sadd.s32 %s180, %s184
          %s186 = smul.addr %s185, 64
          %s187 = scalar_lea.hbm %s0, %s186
          %s189 = sshll.u32 %s179, 4
          %s190 = int_to_ptr.vmem [resolvable:$true] %s189
          %192 = dma.hbm_to_vmem [thread:$0]  %s187, 64, %s190, %s176
        $region20: #{tpu_custom_call.1} parent=15 // pred_fallthru
          _
        // Predicated region
        $region21: #{tpu_custom_call.1} parent=15 // pred_check
          %p193 = pneg %p95
        $region22: #{tpu_custom_call.1} parent=15 // pred_check_branch
          %195 = sbr.rel (%p193) target = $region24
        $region23: #{tpu_custom_call.1} parent=15 // pred_region
          %s196 = sand.u32 %s85, 1
          %s197 = scalar_lea.sflag [#allocation6], %s196
          %s198 = sand.u32 %s85, 1
          %s199 = scalar_lea.vmem [#allocation5], %s198
          %s200 = sadd.s32 %s29, %s31
          %s202 = ssub.s32 16, 16
          %203 = vsyncadd %s197, %s202
          %s204 = smul.addr %s30, 2
          %s205 = sadd.s32 %s200, %s204
          %s206 = smul.addr %s205, 16
          %s207 = scalar_lea.hbm %s1, %s206
          %s209 = sshll.u32 %s199, 4
          %s210 = int_to_ptr.vmem [resolvable:$true] %s209
          %212 = dma.hbm_to_vmem [thread:$0]  %s207, 16, %s210, %s197
        $region24: #{tpu_custom_call.1} parent=15 // pred_fallthru
          _
      $region16: #{tpu_custom_call.1} parent=5 // pred_fallthru
        _
      %p213 = scmp.le.s32.totalorder 1, %s22
      %p214 = scmp.lt.s32.totalorder %s22, 5
      %p215 = pnand %p213, %p214
      %p216 = pneg %p215
      // Predicated region
      $region25: #{tpu_custom_call.1} parent=5 // pred_check
        _
      $region26: #{tpu_custom_call.1} parent=5 // pred_check_branch
        %218 = sbr.rel (%p215) target = $region28
      $region27: #{tpu_custom_call.1} parent=5 // pred_region
        %s219 = ssub.s32 %s22, 1
        %s220 = sand.u32 %s58, 1
        %s221 = scalar_lea.sflag [#allocation3], %s220
        %s222 = sand.u32 %s58, 1
        %s223 = smul.addr %s222, 4
        %s224 = scalar_lea.vmem [#allocation2], %s223
        // Predicated region
        $region29: #{tpu_custom_call.1} parent=27 // pred_check
          %p225 = pneg %p71
        $region30: #{tpu_custom_call.1} parent=27 // pred_check_branch
          %227 = sbr.rel (%p225) target = $region32
        $region31: #{tpu_custom_call.1} parent=27 // pred_region
          %228 = dma.done %s221, 64
        $region32: #{tpu_custom_call.1} parent=27 // pred_fallthru
          _
        %s229 = sand.u32 %s88, 1
        %s230 = scalar_lea.sflag [#allocation6], %s229
        %s231 = sand.u32 %s88, 1
        %s232 = scalar_lea.vmem [#allocation5], %s231
        // Predicated region
        $region33: #{tpu_custom_call.1} parent=27 // pred_check
          %p233 = pneg %p101
        $region34: #{tpu_custom_call.1} parent=27 // pred_check_branch
          %235 = sbr.rel (%p233) target = $region36
        $region35: #{tpu_custom_call.1} parent=27 // pred_region
          %236 = dma.done %s230, 16
        $region36: #{tpu_custom_call.1} parent=27 // pred_fallthru
          _
        %s237 = sand.u32 %s58, 1
        %s238 = scalar_lea.sflag [#allocation3], %s237
        %s239 = sand.u32 %s58, 1
        %s240 = smul.addr %s239, 4
        %s241 = scalar_lea.vmem [#allocation2], %s240
        %p242 = pneg %p71
        %p243 = pneg %p68
        %s244 = sand.u32 %s88, 1
        %s245 = scalar_lea.sflag [#allocation6], %s244
        %s246 = sand.u32 %s88, 1
        %s247 = scalar_lea.vmem [#allocation5], %s246
        %p248 = pneg %p101
        %p249 = pneg %p98
        %p250 = pneg %p127
        %p251 = pneg %p124
        %s252 = sand.u32 %s114, 1
        %s253 = scalar_lea.sflag [#allocation4], %s252
        %s254 = sand.u32 %s114, 1
        %s255 = scalar_lea.vmem [#allocation7], %s254
        %p256 = pneg %p153
        %p257 = pneg %p150
        %s258 = sand.u32 %s140, 1
        %s259 = scalar_lea.sflag [#allocation9], %s258
        %s260 = sand.u32 %s140, 1
        %s261 = scalar_lea.vmem [#allocation8], %s260
        %s262 = sadd.s32 %s32, %s34
        %s263 = sadd.s32 %s32, %s34
        %p264 = scmp.eq.s32.totalorder %s33, 0
        %p265 = scmp.eq.s32.totalorder %s34, 0
        %p266 = pnand %p264, %p265
        %p267 = pneg %p266
        // Predicated region
        $region37: #{tpu_custom_call.1} parent=27 // pred_check
          _
        $region38: #{tpu_custom_call.1} parent=27 // pred_check_branch
          %269 = sbr.rel (%p266) target = $region40
        $region39: #{tpu_custom_call.1} parent=27 // pred_region
          %vm270 = vcmask 24576
          %271 = vst.msk [vmem:[%s255] sm:$0x1] %vm270, 0.0
          %272 = vst.msk [vmem:[%s261] sm:$0x1] %vm270, 0.0
        $region40: #{tpu_custom_call.1} parent=27 // pred_fallthru
          _
        %v273 = vld [vmem:[%s224] sm:$0xf]
        %v274 = vld [vmem:[%s232] sm:$0x1]
        %vm275 = vcmask 1043456
        %v276 = vsel %vm275, %v273, -inf
        %v277 = vrot.slane %v276, 4
        %v278 = vmax.f32 %v276, %v277
        %v279 = vrot.slane %v278, 2
        %v280 = vmax.f32 %v278, %v279
        %v281 = vrot.slane %v280, 1
        %v282 = vmax.f32 %v280, %v281
        %v283 = vsub.f32 %v273, %v282
        %v284 = vmul.f32 %v283, 1.442695
        %v285 = vpow.pop %v284
        %v286 = vsel %vm275, %v285, 0.0
        %v287 = vrot.slane %v286, 4
        %v288 = vadd.f32 %v286, %v287
        %v289 = vrot.slane %v288, 2
        %v290 = vadd.f32 %v288, %v289
        %v291 = vrot.slane %v290, 1
        %v292 = vadd.f32 %v290, %v291
        %v293 = vrcp.pop %v292
        %v294 = vmul.f32 %v285, %v293
        %v295 = vlaneseq
        %v296 = vshrl.u32 %v295, 7
        %v297 = vlaneseq
        %v298 = vshrl.u32 %v297, 7
        %v299 = vsub.s32 0, %v298
        %v300 = vrot.slane %v274, %v299
        %vm301 = vcmp.eq.s32.totalorder %v300, %v296
        %v302 = vsel %vm301, 1, 0
        %v303 = vcvt.s32.f32 %v302
        %v304 = vld [vmem:[%s255] sm:$0x1]
        %v305 = vmul.f32 %v294, %v303
        %v306 = vsel %vm275, %v305, 0.0
        %307 = vadd.xlane.f32.xlu0 %v306
        %v308 = vpop.xlane.xlu0 %307
        %v310 = vlaneseq
        %v311 = vshrl.u32 %v310, 7
        %v312 = vsub.s32 0, %v311
        %v313 = vrot.slane %v308, %v312
        %v314 = vlaneseq
        %v315 = vshrl.u32 %v314, 7
        %v316 = vsub.s32 1, %v315
        %v317 = vrot.slane %v308, %v316
        %v318 = vlaneseq
        %v319 = vshrl.u32 %v318, 7
        %v320 = vsub.s32 2, %v319
        %v321 = vrot.slane %v308, %v320
        %v322 = vlaneseq
        %v323 = vshrl.u32 %v322, 7
        %v324 = vsub.s32 3, %v323
        %v325 = vrot.slane %v308, %v324
        %v326 = vcombine.low %v313, %v317
        %v327 = vcombine.low %v321, %v325
        %v329 = vunpack.c.l.s4 1966171168
        %v330 = vunpack.c.0.s8 %v329
        %v331 = vlaneseq
        %v332 = vshrl.u32 %v331, 7
        %v333 = vsub.s32 %v330, %v332
        %v334 = vrot.slane %v326, %v333
        %v336 = vunpack.c.l.s4 1966171168
        %v337 = vunpack.c.0.s8 %v336
        %v338 = vlaneseq
        %v339 = vshrl.u32 %v338, 7
        %v340 = vsub.s32 %v337, %v339
        %v341 = vrot.slane %v327, %v340
        %v342 = vcombine.low %v334, %v341
        %v344 = vunpack.c.l.s4 1966171168
        %v345 = vunpack.c.0.s8 %v344
        %v346 = vlaneseq
        %v347 = vshrl.u32 %v346, 7
        %v348 = vsub.s32 %v345, %v347
        %v349 = vrot.slane %v342, %v348
        %350 = vset.pattern.permute.xlu0 0
        %351 = vperm.xlu0 %350, %v349
        %v352 = vpop.permute.xlu0 %351
        %v353 = vlaneseq
        %v354 = vand.u32 %v353, 127
        %v355 = vlaneseq
        %v356 = vshrl.u32 %v355, 7
        %v357 = vsub.s32 %v354, %v356
        %v358 = vrot.slane %v352, %v357
        %v360 = vunpack.c.l.s4 1966171168
        %v361 = vunpack.c.0.s8 %v360
        %v362 = vlaneseq
        %v363 = vshrl.u32 %v362, 7
        %v364 = vsub.s32 %v361, %v363
        %v365 = vrot.slane %v358, %v364
        %v367 = vunpack.c.l.s4 1966171168
        %v368 = vunpack.c.0.s8 %v367
        %v369 = vlaneseq
        %v370 = vshrl.u32 %v369, 7
        %v371 = vsub.s32 %v368, %v370
        %v372 = vrot.slane %v365, %v371
        %v374 = vadd.f32 %v304, %v372
        %vm375 = vcmask 24576
        %376 = vst.msk [vmem:[%s255] sm:$0x1] %vm375, %v374
        %v377 = vld [vmem:[%s261] sm:$0x1]
        %v378 = vsel %vm275, %v294, 0.0
        %379 = vadd.xlane.f32.xlu0 %v378
        %v380 = vpop.xlane.xlu0 %379
        %v381 = vsel %vm275, %v303, 0.0
        %382 = vadd.xlane.f32.xlu0 %v381
        %v383 = vpop.xlane.xlu0 %382
        %v384 = vadd.f32 %v380, %v383
        %v386 = vlaneseq
        %v387 = vshrl.u32 %v386, 7
        %v388 = vsub.s32 0, %v387
        %v389 = vrot.slane %v384, %v388
        %v390 = vlaneseq
        %v391 = vshrl.u32 %v390, 7
        %v392 = vsub.s32 1, %v391
        %v393 = vrot.slane %v384, %v392
        %v394 = vlaneseq
        %v395 = vshrl.u32 %v394, 7
        %v396 = vsub.s32 2, %v395
        %v397 = vrot.slane %v384, %v396
        %v398 = vlaneseq
        %v399 = vshrl.u32 %v398, 7
        %v400 = vsub.s32 3, %v399
        %v401 = vrot.slane %v384, %v400
        %v402 = vcombine.low %v389, %v393
        %v403 = vcombine.low %v397, %v401
        %v405 = vunpack.c.l.s4 1966171168
        %v406 = vunpack.c.0.s8 %v405
        %v407 = vlaneseq
        %v408 = vshrl.u32 %v407, 7
        %v409 = vsub.s32 %v406, %v408
        %v410 = vrot.slane %v402, %v409
        %v412 = vunpack.c.l.s4 1966171168
        %v413 = vunpack.c.0.s8 %v412
        %v414 = vlaneseq
        %v415 = vshrl.u32 %v414, 7
        %v416 = vsub.s32 %v413, %v415
        %v417 = vrot.slane %v403, %v416
        %v418 = vcombine.low %v410, %v417
        %v420 = vunpack.c.l.s4 1966171168
        %v421 = vunpack.c.0.s8 %v420
        %v422 = vlaneseq
        %v423 = vshrl.u32 %v422, 7
        %v424 = vsub.s32 %v421, %v423
        %v425 = vrot.slane %v418, %v424
        %426 = vset.pattern.permute.xlu0 0
        %427 = vperm.xlu0 %426, %v425
        %v428 = vpop.permute.xlu0 %427
        %v429 = vlaneseq
        %v430 = vshrl.u32 %v429, 7
        %v431 = vsub.s32 %v354, %v430
        %v432 = vrot.slane %v428, %v431
        %v434 = vunpack.c.l.s4 1966171168
        %v435 = vunpack.c.0.s8 %v434
        %v436 = vlaneseq
        %v437 = vshrl.u32 %v436, 7
        %v438 = vsub.s32 %v435, %v437
        %v439 = vrot.slane %v432, %v438
        %v441 = vunpack.c.l.s4 1966171168
        %v442 = vunpack.c.0.s8 %v441
        %v443 = vlaneseq
        %v444 = vshrl.u32 %v443, 7
        %v445 = vsub.s32 %v442, %v444
        %v446 = vrot.slane %v439, %v445
        %v448 = vadd.f32 %v377, %v446
        %449 = vst.msk [vmem:[%s261] sm:$0x1] %vm375, %v448
        %s450 = sand.u32 %s114, 1
        %s451 = scalar_lea.sflag [#allocation4], %s450
        %s452 = sand.u32 %s114, 1
        %s453 = scalar_lea.vmem [#allocation7], %s452
        %s454 = sand.u32 %s140, 1
        %s455 = scalar_lea.sflag [#allocation9], %s454
        %s456 = sand.u32 %s140, 1
        %s457 = scalar_lea.vmem [#allocation8], %s456
        // Predicated region
        $region41: #{tpu_custom_call.1} parent=27 // pred_check
          %p458 = pneg %p124
        $region42: #{tpu_custom_call.1} parent=27 // pred_check_branch
          %460 = sbr.rel (%p458) target = $region44
        $region43: #{tpu_custom_call.1} parent=27 // pred_region
          %s462 = ssub.s32 16, 16
          %463 = vsyncadd %s451, %s462
          %s464 = smul.addr %s32, 16
          %s465 = scalar_lea.hbm %s2, %s464
          %s467 = sshll.u32 %s453, 4
          %s468 = int_to_ptr.vmem [resolvable:$true] %s467
          %470 = dma.vmem_to_hbm [thread:$0]  %s468, 16, %s465, %s451
        $region44: #{tpu_custom_call.1} parent=27 // pred_fallthru
          _
        // Predicated region
        $region45: #{tpu_custom_call.1} parent=27 // pred_check
          %p471 = pneg %p150
        $region46: #{tpu_custom_call.1} parent=27 // pred_check_branch
          %473 = sbr.rel (%p471) target = $region48
        $region47: #{tpu_custom_call.1} parent=27 // pred_region
          %s475 = ssub.s32 16, 16
          %476 = vsyncadd %s455, %s475
          %s477 = smul.addr %s32, 16
          %s478 = scalar_lea.hbm %s3, %s477
          %s480 = sshll.u32 %s457, 4
          %s481 = int_to_ptr.vmem [resolvable:$true] %s480
          %483 = dma.vmem_to_hbm [thread:$0]  %s481, 16, %s478, %s455
        $region48: #{tpu_custom_call.1} parent=27 // pred_fallthru
          _
      $region28: #{tpu_custom_call.1} parent=5 // pred_fallthru
        _
      %p484 = scmp.le.s32.totalorder 2, %s22
      // Predicated region
      $region49: #{tpu_custom_call.1} parent=5 // pred_check
        %p485 = pneg %p484
      $region50: #{tpu_custom_call.1} parent=5 // pred_check_branch
        %487 = sbr.rel (%p485) target = $region52
      $region51: #{tpu_custom_call.1} parent=5 // pred_region
        %s488 = ssub.s32 %s22, 2
        // Predicated region
        $region53: #{tpu_custom_call.1} parent=51 // pred_check
          %p489 = pneg %p130
        $region54: #{tpu_custom_call.1} parent=51 // pred_check_branch
          %491 = sbr.rel (%p489) target = $region56
        $region55: #{tpu_custom_call.1} parent=51 // pred_region
          %s492 = sand.u32 %s115, 1
          %s493 = scalar_lea.sflag [#allocation4], %s492
          %s494 = sand.u32 %s115, 1
          %s495 = scalar_lea.vmem [#allocation7], %s494
          %496 = dma.done %s493, 16
        $region56: #{tpu_custom_call.1} parent=51 // pred_fallthru
          _
        // Predicated region
        $region57: #{tpu_custom_call.1} parent=51 // pred_check
          %p497 = pneg %p156
        $region58: #{tpu_custom_call.1} parent=51 // pred_check_branch
          %499 = sbr.rel (%p497) target = $region60
        $region59: #{tpu_custom_call.1} parent=51 // pred_region
          %s500 = sand.u32 %s141, 1
          %s501 = scalar_lea.sflag [#allocation9], %s500
          %s502 = sand.u32 %s141, 1
          %s503 = scalar_lea.vmem [#allocation8], %s502
          %504 = dma.done %s501, 16
        $region60: #{tpu_custom_call.1} parent=51 // pred_fallthru
          _
      $region52: #{tpu_custom_call.1} parent=5 // pred_fallthru
        _
    $region6: #{tpu_custom_call.1} parent=1 // loop_footer
      %s26 = sadd.s32 1, %s22
    $region7: #{tpu_custom_call.1} parent=1 // loop_footer_branch
      %21 = sbr.rel target = $region3
    $region8: #{tpu_custom_call.1} parent=1 // loop_exit
      _
    %505 = vsyncpa [#allocation3], 1
    %s506 = scalar_lea.sflag [#allocation3], 1
    %507 = vsyncpa %s506, 1
    %508 = vsyncpa [#allocation6], 1
    %s509 = scalar_lea.sflag [#allocation6], 1
    %510 = vsyncpa %s509, 1
    %511 = vsyncpa [#allocation4], 1
    %s512 = scalar_lea.sflag [#allocation4], 1
    %513 = vsyncpa %s512, 1
    %514 = vsyncpa [#allocation9], 1
    %s515 = scalar_lea.sflag [#allocation9], 1
    %516 = vsyncpa %s515, 1

</llo_original>
